<compile_context>
chip_gen: v6e
topology: v6e:2x2x1
jax: 0.10.0
libtpu: 0.0.40
codegen_flags: <defaults>
</compile_context>

<pallas_src>
import functools

import jax
import jax.numpy as jnp
from jax.experimental import pallas as pl
from jax.experimental.pallas import tpu as pltpu


_BLOCK_BYTES_BUDGET = 8 * 1024 * 1024  # per in/out block, single buffer
_MAX_TILE_ROWS = 2048


def _choose_tile_rows(rows, hidden, dtype):
    itemsize = jnp.dtype(dtype).itemsize
    # sublane packing: 8 rows/vreg for 32-bit, 16 for 16-bit, 32 for 8-bit
    sublane = max(8, 32 // max(1, itemsize))
    max_rows_by_vmem = max(sublane, _BLOCK_BYTES_BUDGET // max(1, hidden * itemsize))
    tile = min(rows, max_rows_by_vmem, _MAX_TILE_ROWS)
    tile = max(sublane, (tile // sublane) * sublane)  # align to sublane multiple
    return tile


def _rmsnorm_kernel(x_ref, w_ref, o_ref, *, eps, inv_hidden):
    # x_ref: (tile_rows, hidden); w_ref: (1, hidden) already f32
    x = x_ref[...].astype(jnp.float32)
    # mean(x^2) as sum * compile-time constant -> no VPU divide
    ms = jnp.sum(x * x, axis=-1, keepdims=True) * inv_hidden     # (tile_rows, 1)
    inv = jax.lax.rsqrt(ms + eps)                                # EUP, free slot
    o_ref[...] = (x * inv * w_ref[...]).astype(o_ref.dtype)


def rmsnorm(x, weight, eps=1e-5, tile_rows=None):
    """x: [batch, 1, seq, hidden], weight: [hidden] -> same shape/dtype as x."""
    orig_shape = x.shape
    hidden = orig_shape[-1]
    assert weight.shape == (hidden,)

    x2d = x.reshape(-1, hidden)
    rows = x2d.shape[0]
    # Pre-cast weight once (tiny HBM cost); kernel body never re-casts it.
    w2d = weight.astype(jnp.float32).reshape(1, hidden)

    if tile_rows is None:
        tile_rows = _choose_tile_rows(rows, hidden, x.dtype)

    num_tiles = pl.cdiv(rows, tile_rows)
    padded_rows = num_tiles * tile_rows
    if padded_rows != rows:
        x2d = jnp.pad(x2d, ((0, padded_rows - rows), (0, 0)))

    itemsize = jnp.dtype(x.dtype).itemsize
    block_bytes = tile_rows * hidden * itemsize
    # double-buffered input + output blocks + weight + slack
    vmem_bytes = 4 * block_bytes + hidden * 4 + (4 << 20)
    vmem_bytes = max(vmem_bytes, 16 << 20)

    kernel = functools.partial(_rmsnorm_kernel, eps=eps, inv_hidden=1.0 / hidden)

    cost = pl.CostEstimate(
        flops=3 * rows * hidden,
        transcendentals=rows,
        bytes_accessed=2 * rows * hidden * itemsize + hidden * 4,
    )

    out2d = pl.pallas_call(
        kernel,
        out_shape=jax.ShapeDtypeStruct((padded_rows, hidden), x.dtype),
        grid_spec=pltpu.PrefetchScalarGridSpec(
            num_scalar_prefetch=0,
            grid=(num_tiles,),
            in_specs=[
                pl.BlockSpec((tile_rows, hidden), lambda i: (i, 0)),
                pl.BlockSpec((1, hidden), lambda i: (0, 0)),   # constant -> DMA elided
            ],
            out_specs=pl.BlockSpec((tile_rows, hidden), lambda i: (i, 0)),
        ),
        compiler_params=pltpu.CompilerParams(
            dimension_semantics=("parallel",),
            vmem_limit_bytes=int(vmem_bytes),
        ),
        cost_estimate=cost,
    )(x2d, w2d)

    if padded_rows != rows:
        out2d = out2d[:rows]
    return out2d.reshape(orig_shape)


def rmsnorm_ref(x, weight, eps=1e-5):
    xf = x.astype(jnp.float32)
    ms = jnp.mean(xf * xf, axis=-1, keepdims=True)
    return (xf * jax.lax.rsqrt(ms + eps) * weight.astype(jnp.float32)).astype(x.dtype)


if __name__ == "__main__":
    key = jax.random.PRNGKey(0)
    norm_eps = 1e-5  # Llama-2 70B config norm_eps

    hidden = 128
    kx, kw, kx2 = jax.random.split(key, 3)
    # Deterministic synthetic "attention_norm.weight" parameter of shape [hidden].
    weight = 1.0 + 0.01 * jax.random.normal(kw, (hidden,), dtype=jnp.float32)

    # Case 1: evenly tiled rows.
    x1 = jax.random.normal(kx, (1, 1, 8, hidden), dtype=jnp.float32)
    out1 = jax.block_until_ready(rmsnorm(x1, weight, eps=norm_eps))
    ref1 = rmsnorm_ref(x1, weight, eps=norm_eps)
    assert out1.shape == x1.shape
    assert jnp.allclose(out1, ref1, atol=1e-5, rtol=1e-5), "mismatch vs reference (case 1)"

    # Case 2: row count not a multiple of the tile -> exercises pad/slice tail path.
    x2 = jax.random.normal(kx2, (1, 1, 12, hidden), dtype=jnp.float32)
    out2 = jax.block_until_ready(rmsnorm(x2, weight, eps=norm_eps))
    ref2 = rmsnorm_ref(x2, weight, eps=norm_eps)
    assert out2.shape == x2.shape
    assert jnp.allclose(out2, ref2, atol=1e-5, rtol=1e-5), "mismatch vs reference (case 2)"

    print("KERNEL_OK")
</pallas_src>

<mosaic_0001>
module attributes {stable_mosaic.version = 11 : i64} {
  func.func @_rmsnorm_kernel(%arg0: i32, %arg1: memref<8x128xf32, #tpu.memory_space<vmem>>, %arg2: memref<1x128xf32, #tpu.memory_space<vmem>>, %arg3: memref<8x128xf32, #tpu.memory_space<vmem>>) attributes {dimension_semantics = [#tpu.dimension_semantics<parallel>], iteration_bounds = array<i64: 1>, scalar_prefetch = 0 : i64, scratch_operands = 0 : i64, tpu.core_type = #tpu.core_type<tc>, window_params = [{transform_indices = @transform_0, window_bounds = array<i64: 8, 128>}, {pipeline_mode = #tpu.pipeline_mode<synchronous>, transform_indices = @transform_1, window_bounds = array<i64: 1, 128>}, {transform_indices = @transform_2, window_bounds = array<i64: 8, 128>}]} {
    %c0 = arith.constant 0 : index
    %c0_0 = arith.constant 0 : index
    %0 = vector.load %arg1[%c0, %c0_0] : memref<8x128xf32, #tpu.memory_space<vmem>>, vector<8x128xf32>
    %1 = arith.mulf %0, %0 : vector<8x128xf32>
    %cst = arith.constant dense<0.000000e+00> : vector<8xf32>
    %2 = vector.multi_reduction <add>, %1, %cst [1] : vector<8x128xf32> to vector<8xf32>
    %3 = vector.shape_cast %2 : vector<8xf32> to vector<8x1xf32>
    %cst_1 = arith.constant 7.812500e-03 : f32
    %4 = vector.broadcast %cst_1 : f32 to vector<8x1xf32>
    %5 = arith.mulf %3, %4 : vector<8x1xf32>
    %cst_2 = arith.constant 9.99999974E-6 : f32
    %6 = vector.broadcast %cst_2 : f32 to vector<8x1xf32>
    %7 = arith.addf %5, %6 : vector<8x1xf32>
    %8 = math.rsqrt %7 : vector<8x1xf32>
    %9 = vector.broadcast %8 : vector<8x1xf32> to vector<8x128xf32>
    %10 = arith.mulf %0, %9 : vector<8x128xf32>
    %c0_3 = arith.constant 0 : index
    %c0_4 = arith.constant 0 : index
    %11 = vector.load %arg2[%c0_3, %c0_4] : memref<1x128xf32, #tpu.memory_space<vmem>>, vector<1x128xf32>
    %12 = vector.broadcast %11 : vector<1x128xf32> to vector<8x128xf32>
    %13 = arith.mulf %10, %12 : vector<8x128xf32>
    %c0_5 = arith.constant 0 : index
    %c0_6 = arith.constant 0 : index
    %14 = vector.load %arg3[%c0_5, %c0_6] : memref<8x128xf32, #tpu.memory_space<vmem>>, vector<8x128xf32>
    tpu.vector_store %arg3[%c0_5, %c0_6], %13 {strides = array<i32>} : memref<8x128xf32, #tpu.memory_space<vmem>>, vector<8x128xf32>,
    return
  }
  func.func @transform_0(%arg0: i32) -> (i32, i32) {
    %c0_i32 = arith.constant 0 : i32
    %c0_i32_0 = arith.constant 0 : i32
    return %arg0, %c0_i32 : i32, i32
  }
  func.func @transform_1(%arg0: i32) -> (i32, i32) {
    %c0_i32 = arith.constant 0 : i32
    %c0_i32_0 = arith.constant 0 : i32
    %c0_i32_1 = arith.constant 0 : i32
    return %c0_i32, %c0_i32_0 : i32, i32
  }
  func.func @transform_2(%arg0: i32) -> (i32, i32) {
    %c0_i32 = arith.constant 0 : i32
    %c0_i32_0 = arith.constant 0 : i32
    return %arg0, %c0_i32 : i32, i32
  }
}

</mosaic_0001>

<llo_original>
// kernel: tpu_custom_call.1
$region0: #{tpu_custom_call.1}
  #allocation0 [shape = 'u32[]', space=smem, size = 0x4, offset = 0x4, fixed_abs, tag = 'smem constant byte address 0x4 - core index']
  #allocation1 [shape = 'u32[144,128]{1,0:T(1,128)}', space=vmem, size = 0x12000, scoped, tag = 'internal scratch']
  %s0 = inlined_call_operand.hbm [shape: f32[8,128], index: 0, kind: input, shape index: {}]
  %s1 = inlined_call_operand.vmem [shape: f32[1,128], index: 1, kind: input, shape index: {}]
  %s2 = inlined_call_operand.hbm [shape: f32[8,128], index: 2, kind: output, shape index: {}]
  %s3 = sld [smem:[#allocation0]]
  $region22: #{tpu_custom_call.1} parent=0
    _
  %s5 = ssub.s32 1, %s3
  %s6 = scalar_select 0, %s5, %s3
  $region1: #{tpu_custom_call.1} parent=0
    #allocation2 [shape = 'u8[4096]{0}', space=vmem, size = 0x1000, scoped, tag = 'input window, operand 0, single buffered']
    #allocation3 [shape = 's32[1]{0}', space=sflag, size = 0x4, scoped, tag = 'scoped memory for tpu_custom_call.1']
    #allocation4 [shape = 's32[1]{0}', space=sflag, size = 0x4, scoped, tag = 'scoped memory for tpu_custom_call.1']
    #allocation5 [shape = 'u8[4096]{0}', space=vmem, size = 0x1000, scoped, tag = 'output window, operand 0, single buffered']
    %7 = vsyncpa [#allocation3], 0
    %8 = vsyncpa [#allocation4], 0
    // Predicated region
    $region2: #{tpu_custom_call.1} parent=1 // pred_check
      _
    $region3: #{tpu_custom_call.1} parent=1 // pred_check_branch
      %10 = sbr.rel (0) target = $region5
    $region4: #{tpu_custom_call.1} parent=1 // pred_region
      %s12 = ssub.s32 128, 128
      %13 = vsyncadd [#allocation3], %s12
      %s15 = sshll.u32 [#allocation2], 4
      %s16 = int_to_ptr.vmem [resolvable:$true] %s15
      %18 = dma.hbm_to_vmem [thread:$0]  %s0, 128, %s16, [#allocation3]
    $region5: #{tpu_custom_call.1} parent=1 // pred_fallthru
      _
    // Predicated region
    $region6: #{tpu_custom_call.1} parent=1 // pred_check
      _
    $region7: #{tpu_custom_call.1} parent=1 // pred_check_branch
      %20 = sbr.rel (0) target = $region9
    $region8: #{tpu_custom_call.1} parent=1 // pred_region
      _
    $region9: #{tpu_custom_call.1} parent=1 // pred_fallthru
      _
    // Predicated region
    $region10: #{tpu_custom_call.1} parent=1 // pred_check
      _
    $region11: #{tpu_custom_call.1} parent=1 // pred_check_branch
      %22 = sbr.rel (0) target = $region13
    $region12: #{tpu_custom_call.1} parent=1 // pred_region
      %23 = dma.done [#allocation3], 128
    $region13: #{tpu_custom_call.1} parent=1 // pred_fallthru
      _
    %v24 = vld [vmem:[#allocation2] sm:$0xff]
    %v25 = vmul.f32 %v24, %v24
    %26 = vadd.xlane.f32.xlu0 %v25
    %v27 = vpop.xlane.xlu0 %26
    %v28 = vmul.f32 %v27, 0.0078125
    %v29 = vadd.f32 %v28, 1e-05
    %v30 = vrsqrt.pop %v29
    %v31 = vmul.f32 %v24, %v30
    %v32 = vld [vmem:[%s1] sm:$0x1]
    %v34 = vlaneseq
    %v35 = vshrl.u32 %v34, 7
    %v36 = vsub.s32 0, %v35
    %v37 = vrot.slane %v32, %v36
    %v39 = vmul.f32 %v31, %v37
    %40 = vst [vmem:[#allocation5] sm:$0xff] %v39
    // Predicated region
    $region14: #{tpu_custom_call.1} parent=1 // pred_check
      _
    $region15: #{tpu_custom_call.1} parent=1 // pred_check_branch
      %42 = sbr.rel (0) target = $region17
    $region16: #{tpu_custom_call.1} parent=1 // pred_region
      %s44 = ssub.s32 128, 128
      %45 = vsyncadd [#allocation4], %s44
      %s47 = sshll.u32 [#allocation5], 4
      %s48 = int_to_ptr.vmem [resolvable:$true] %s47
      %50 = dma.vmem_to_hbm [thread:$0]  %s48, 128, %s2, [#allocation4]
    $region17: #{tpu_custom_call.1} parent=1 // pred_fallthru
      _
    // Predicated region
    $region18: #{tpu_custom_call.1} parent=1 // pred_check
      _
    $region19: #{tpu_custom_call.1} parent=1 // pred_check_branch
      %52 = sbr.rel (0) target = $region21
    $region20: #{tpu_custom_call.1} parent=1 // pred_region
      %53 = dma.done [#allocation4], 128
    $region21: #{tpu_custom_call.1} parent=1 // pred_fallthru
      _
    %54 = vsyncpa [#allocation3], 1
    %55 = vsyncpa [#allocation4], 1

</llo_original>
